<compile_context>
chip_gen: v5e
topology: v5e:2x2
jax: 0.10.0
libtpu: 0.0.40
codegen_flags: <defaults>
</compile_context>

<pallas_src>
import jax
import jax.numpy as jnp
from jax.experimental import pallas as pl
from jax.experimental.pallas import tpu as pltpu

_LANE = 128   # vreg lane width
_SUB = 8      # vreg sublane width


def _round_up(n, m):
    return ((n + m - 1) // m) * m


# ---------------------------------------------------------------------------
# Kernel: full forward for one batch tile: (Linear -> ELU) x 2, Linear -> Sigmoid
# ---------------------------------------------------------------------------
def mlp_kernel(x_ref, w1_ref, b1_ref, w2_ref, b2_ref, w3_ref, b3_ref, o_ref):
    wd = w1_ref.dtype  # matmul input dtype (f32 or bf16); accumulation is f32.
    x = x_ref[...].astype(wd)

    def elu(v):
        # nn.ELU(alpha=1.0): v if v > 0 else exp(v) - 1.  Clamp the exp argument
        # so the dead branch never computes exp(large).  All in f32.
        return jnp.where(v > 0, v, jnp.exp(jnp.minimum(v, 0.0)) - 1.0)

    # Layer 1: Linear + ELU (bias add / ELU in f32)
    h1 = jnp.dot(x, w1_ref[...], preferred_element_type=jnp.float32) + b1_ref[...]
    h1 = elu(h1)
    # Layer 2: Linear + ELU
    h2 = jnp.dot(h1.astype(wd), w2_ref[...],
                 preferred_element_type=jnp.float32) + b2_ref[...]
    h2 = elu(h2)
    # Output layer: Linear + Sigmoid (reciprocal on the EUP instead of a VALU divide)
    logits = jnp.dot(h2.astype(wd), w3_ref[...],
                     preferred_element_type=jnp.float32) + b3_ref[...]
    sig = pl.reciprocal(1.0 + jnp.exp(-logits), approx=True)
    o_ref[...] = sig.astype(o_ref.dtype)


# ---------------------------------------------------------------------------
# One-time parameter preparation (padding + optional bf16 cast) -- hoisted out
# of the per-call path so the forward pass only pads x.
# ---------------------------------------------------------------------------
def prepare_params(params, weight_dtype=jnp.float32):
    """Pad feature dims to lane width and cast weights once.

    Zero padding is exact: ELU(0)=0, zero rows/cols contribute nothing, and
    padded output lanes are sliced off by the wrapper.
    Biases stay f32 (bias add / ELU / sigmoid run in f32).
    """
    w1, b1 = params["w1"], params["b1"]
    w2, b2 = params["w2"], params["b2"]
    w3, b3 = params["w3"], params["b3"]
    F, H1 = w1.shape
    H2, C = w2.shape[1], w3.shape[1]

    F_p = _round_up(F, _LANE)
    H1_p = _round_up(H1, _LANE)
    H2_p = _round_up(H2, _LANE)
    C_p = _round_up(C, _LANE)

    def pad2(a, rows, cols, dtype):
        return (jnp.zeros((rows, cols), dtype)
                .at[: a.shape[0], : a.shape[1]].set(a.astype(dtype)))

    prepared = {
        "w1": pad2(w1, F_p, H1_p, weight_dtype),
        "b1": pad2(b1, 1, H1_p, jnp.float32),
        "w2": pad2(w2, H1_p, H2_p, weight_dtype),
        "b2": pad2(b2, 1, H2_p, jnp.float32),
        "w3": pad2(w3, H2_p, C_p, weight_dtype),
        "b3": pad2(b3, 1, C_p, jnp.float32),
        "input_size": F,
        "num_classes": C,
        "dims_padded": (F_p, H1_p, H2_p, C_p),
    }
    return prepared


def _weight_vmem_bytes(prepared):
    # Resident weights/biases are single-buffered (pl.Buffered(1)).
    total = 0
    for name in ("w1", "b1", "w2", "b2", "w3", "b3"):
        a = prepared[name]
        rows = max(a.shape[0], _SUB)  # VMEM tile rows pad to sublane multiple
        total += rows * a.shape[1] * a.dtype.itemsize
    return total


def _pick_tm(B, F_p, C_p, weight_bytes):
    """Batch tile: full (padded) batch for small B; otherwise the candidate from
    {512, 384, 256} minimizing batch padding, gated on the VMEM budget."""
    if B <= 512:
        tm = _round_up(B, _SUB)
    else:
        best = None
        for cand in (512, 384, 256):
            pad = _round_up(B, cand) - B
            key = (pad, -cand)  # least padding, prefer larger tile on ties
            if best is None or key < best[0]:
                best = (key, cand)
        tm = best[1]
    # VMEM gate: resident weights + double-buffered x/out tiles must fit.
    budget = (48 << 20) - weight_bytes
    while tm > _SUB and 2 * tm * (F_p + C_p) * 4 > budget:
        tm = _round_up(tm // 2, _SUB)
    return max(tm, _SUB)


# ---------------------------------------------------------------------------
# Forward wrapper
# ---------------------------------------------------------------------------
def neural_net_forward(x, prepared, *, tm=None):
    """x: (B, input_size) float32.  prepared: output of prepare_params()."""
    B, F = x.shape
    F_p, H1_p, H2_p, C_p = prepared["dims_padded"]
    C = prepared["num_classes"]
    assert F == prepared["input_size"]

    weight_bytes = _weight_vmem_bytes(prepared)
    if tm is None:
        tm = _pick_tm(B, F_p, C_p, weight_bytes)
    B_p = _round_up(B, tm)

    # Only x is padded per call (weights were padded once in prepare_params).
    if B_p == B and F_p == F:
        x_p = x.astype(jnp.float32)
    else:
        x_p = jnp.zeros((B_p, F_p), jnp.float32).at[:B, :F].set(x)

    # VMEM limit from the actual footprint, capped for v7x (64 MiB per TC).
    need = weight_bytes + 2 * tm * F_p * 4 + 2 * tm * C_p * 4
    vmem_limit = min(max(int(need * 1.5) + (4 << 20), 16 << 20), 56 << 20)
    # TODO(synk): add a K/N-tiled fallback (f32 VMEM accumulator + pl.when
    # init/finalize) when the resident-weight footprint exceeds the per-
    # generation VMEM budget instead of relying on resident weights.

    grid = (B_p // tm,)

    def resident(shape):
        # Constant index_map -> keep a single copy resident in VMEM.
        return pl.BlockSpec(shape, lambda i: (0, 0), pipeline_mode=pl.Buffered(1))

    out_p = pl.pallas_call(
        mlp_kernel,
        out_shape=jax.ShapeDtypeStruct((B_p, C_p), jnp.float32),
        grid_spec=pltpu.PrefetchScalarGridSpec(
            num_scalar_prefetch=0,
            grid=grid,
            in_specs=[
                pl.BlockSpec((tm, F_p), lambda i: (i, 0)),   # x tile (pipelined)
                resident(prepared["w1"].shape), resident(prepared["b1"].shape),
                resident(prepared["w2"].shape), resident(prepared["b2"].shape),
                resident(prepared["w3"].shape), resident(prepared["b3"].shape),
            ],
            out_specs=pl.BlockSpec((tm, C_p), lambda i: (i, 0)),  # lane-dense output
        ),
        compiler_params=pltpu.CompilerParams(
            dimension_semantics=("parallel",),
            vmem_limit_bytes=vmem_limit),
    )(x_p, prepared["w1"], prepared["b1"], prepared["w2"], prepared["b2"],
      prepared["w3"], prepared["b3"])

    return out_p[:B, :C]


# ---------------------------------------------------------------------------
# Init + pure-JAX reference
# ---------------------------------------------------------------------------
def init_params(key, input_size, hidden_sizes, num_classes):
    """Deterministic PyTorch-style uniform(-1/sqrt(fan_in), 1/sqrt(fan_in)) init.
    Weights stored as (in, out) = transpose of nn.Linear.weight."""
    dims = [input_size] + list(hidden_sizes) + [num_classes]
    params = {}
    for idx in range(len(dims) - 1):
        fan_in, fan_out = dims[idx], dims[idx + 1]
        key, kw, kb = jax.random.split(key, 3)
        bound = 1.0 / jnp.sqrt(fan_in)
        params[f"w{idx + 1}"] = jax.random.uniform(
            kw, (fan_in, fan_out), jnp.float32, -bound, bound)
        params[f"b{idx + 1}"] = jax.random.uniform(
            kb, (1, fan_out), jnp.float32, -bound, bound)
    return params


def reference_forward(x, params):
    """Pure-JAX reference for sanity checking."""
    elu = lambda v: jnp.where(v > 0, v, jnp.exp(jnp.minimum(v, 0.0)) - 1.0)
    h = elu(x @ params["w1"] + params["b1"])
    h = elu(h @ params["w2"] + params["b2"])
    return jax.nn.sigmoid(h @ params["w3"] + params["b3"])


if __name__ == "__main__":
    batch = 16
    input_size = 16
    hidden_sizes = [32, 32]
    num_classes = 1

    key = jax.random.PRNGKey(0)
    key, kx = jax.random.split(key)
    x = jax.random.normal(kx, (batch, input_size), jnp.float32)
    params = init_params(key, input_size, hidden_sizes, num_classes)

    # Pad/cast weights ONCE (hoisted out of the per-call path).
    # For large hidden layers on v6e/v7x pass weight_dtype=jnp.bfloat16.
    prepared = prepare_params(params, weight_dtype=jnp.float32)

    out = neural_net_forward(x, prepared)
    out = jax.block_until_ready(out)

    ref = reference_forward(x, params)
    assert out.shape == (batch, num_classes)
    # approx=True reciprocal on the EUP: allow a small tolerance vs. exact sigmoid.
    assert jnp.allclose(out, ref, atol=5e-3, rtol=5e-3)
    print("KERNEL_OK")
</pallas_src>

<mosaic_0001>
module attributes {stable_mosaic.version = 11 : i64} {
  func.func @mlp_kernel(%arg0: i32, %arg1: memref<16x128xf32, #tpu.memory_space<vmem>>, %arg2: memref<128x128xf32, #tpu.memory_space<vmem>>, %arg3: memref<1x128xf32, #tpu.memory_space<vmem>>, %arg4: memref<128x128xf32, #tpu.memory_space<vmem>>, %arg5: memref<1x128xf32, #tpu.memory_space<vmem>>, %arg6: memref<128x128xf32, #tpu.memory_space<vmem>>, %arg7: memref<1x128xf32, #tpu.memory_space<vmem>>, %arg8: memref<16x128xf32, #tpu.memory_space<vmem>>) attributes {dimension_semantics = [#tpu.dimension_semantics<parallel>], iteration_bounds = array<i64: 1>, scalar_prefetch = 0 : i64, scratch_operands = 0 : i64, tpu.core_type = #tpu.core_type<tc>, window_params = [{transform_indices = @transform_0, window_bounds = array<i64: 16, 128>}, {pipeline_mode = #tpu.pipeline_mode<synchronous>, transform_indices = @transform_1, window_bounds = array<i64: 128, 128>}, {pipeline_mode = #tpu.pipeline_mode<synchronous>, transform_indices = @transform_2, window_bounds = array<i64: 1, 128>}, {pipeline_mode = #tpu.pipeline_mode<synchronous>, transform_indices = @transform_3, window_bounds = array<i64: 128, 128>}, {pipeline_mode = #tpu.pipeline_mode<synchronous>, transform_indices = @transform_4, window_bounds = array<i64: 1, 128>}, {pipeline_mode = #tpu.pipeline_mode<synchronous>, transform_indices = @transform_5, window_bounds = array<i64: 128, 128>}, {pipeline_mode = #tpu.pipeline_mode<synchronous>, transform_indices = @transform_6, window_bounds = array<i64: 1, 128>}, {transform_indices = @transform_7, window_bounds = array<i64: 16, 128>}]} {
    %c0 = arith.constant 0 : index
    %c0_0 = arith.constant 0 : index
    %0 = vector.load %arg1[%c0, %c0_0] : memref<16x128xf32, #tpu.memory_space<vmem>>, vector<16x128xf32>
    %c0_1 = arith.constant 0 : index
    %c0_2 = arith.constant 0 : index
    %1 = vector.load %arg2[%c0_1, %c0_2] : memref<128x128xf32, #tpu.memory_space<vmem>>, vector<128x128xf32>
    %cst = arith.constant dense<0.000000e+00> : vector<16x128xf32>
    %2 = tpu.matmul %0, %1, %cst {dimension_numbers = #tpu.dot_dimension_numbers<[1], [0], [0], [1], [0, 0, 1, 1], [], []>} : vector<16x128xf32>, vector<128x128xf32>, vector<16x128xf32> -> vector<16x128xf32>
    %c0_3 = arith.constant 0 : index
    %c0_4 = arith.constant 0 : index
    %3 = vector.load %arg3[%c0_3, %c0_4] : memref<1x128xf32, #tpu.memory_space<vmem>>, vector<1x128xf32>
    %4 = vector.broadcast %3 : vector<1x128xf32> to vector<16x128xf32>
    %5 = arith.addf %2, %4 : vector<16x128xf32>
    %cst_5 = arith.constant 0.000000e+00 : f32
    %6 = vector.broadcast %cst_5 : f32 to vector<16x128xf32>
    %7 = arith.cmpf ogt, %5, %6 : vector<16x128xf32>
    %cst_6 = arith.constant 0.000000e+00 : f32
    %8 = vector.broadcast %cst_6 : f32 to vector<16x128xf32>
    %9 = arith.minimumf %5, %8 : vector<16x128xf32>
    %10 = math.exp %9 : vector<16x128xf32>
    %cst_7 = arith.constant 1.000000e+00 : f32
    %11 = vector.broadcast %cst_7 : f32 to vector<16x128xf32>
    %12 = arith.subf %10, %11 : vector<16x128xf32>
    %13 = arith.select %7, %5, %12 : vector<16x128xi1>, vector<16x128xf32>
    %c0_8 = arith.constant 0 : index
    %c0_9 = arith.constant 0 : index
    %14 = vector.load %arg4[%c0_8, %c0_9] : memref<128x128xf32, #tpu.memory_space<vmem>>, vector<128x128xf32>
    %cst_10 = arith.constant dense<0.000000e+00> : vector<16x128xf32>
    %15 = tpu.matmul %13, %14, %cst_10 {dimension_numbers = #tpu.dot_dimension_numbers<[1], [0], [0], [1], [0, 0, 1, 1], [], []>} : vector<16x128xf32>, vector<128x128xf32>, vector<16x128xf32> -> vector<16x128xf32>
    %c0_11 = arith.constant 0 : index
    %c0_12 = arith.constant 0 : index
    %16 = vector.load %arg5[%c0_11, %c0_12] : memref<1x128xf32, #tpu.memory_space<vmem>>, vector<1x128xf32>
    %17 = vector.broadcast %16 : vector<1x128xf32> to vector<16x128xf32>
    %18 = arith.addf %15, %17 : vector<16x128xf32>
    %cst_13 = arith.constant 0.000000e+00 : f32
    %19 = vector.broadcast %cst_13 : f32 to vector<16x128xf32>
    %20 = arith.cmpf ogt, %18, %19 : vector<16x128xf32>
    %cst_14 = arith.constant 0.000000e+00 : f32
    %21 = vector.broadcast %cst_14 : f32 to vector<16x128xf32>
    %22 = arith.minimumf %18, %21 : vector<16x128xf32>
    %23 = math.exp %22 : vector<16x128xf32>
    %cst_15 = arith.constant 1.000000e+00 : f32
    %24 = vector.broadcast %cst_15 : f32 to vector<16x128xf32>
    %25 = arith.subf %23, %24 : vector<16x128xf32>
    %26 = arith.select %20, %18, %25 : vector<16x128xi1>, vector<16x128xf32>
    %c0_16 = arith.constant 0 : index
    %c0_17 = arith.constant 0 : index
    %27 = vector.load %arg6[%c0_16, %c0_17] : memref<128x128xf32, #tpu.memory_space<vmem>>, vector<128x128xf32>
    %cst_18 = arith.constant dense<0.000000e+00> : vector<16x128xf32>
    %28 = tpu.matmul %26, %27, %cst_18 {dimension_numbers = #tpu.dot_dimension_numbers<[1], [0], [0], [1], [0, 0, 1, 1], [], []>} : vector<16x128xf32>, vector<128x128xf32>, vector<16x128xf32> -> vector<16x128xf32>
    %c0_19 = arith.constant 0 : index
    %c0_20 = arith.constant 0 : index
    %29 = vector.load %arg7[%c0_19, %c0_20] : memref<1x128xf32, #tpu.memory_space<vmem>>, vector<1x128xf32>
    %30 = vector.broadcast %29 : vector<1x128xf32> to vector<16x128xf32>
    %31 = arith.addf %28, %30 : vector<16x128xf32>
    %cst_21 = arith.constant 0.000000e+00 : f32
    %32 = vector.broadcast %cst_21 : f32 to vector<16x128xf32>
    %33 = arith.subf %32, %31 : vector<16x128xf32>
    %34 = math.exp %33 : vector<16x128xf32>
    %cst_22 = arith.constant 1.000000e+00 : f32
    %35 = vector.broadcast %cst_22 : f32 to vector<16x128xf32>
    %36 = arith.addf %35, %34 : vector<16x128xf32>
    %37 = tpu.reciprocal %36 {approx = true} : vector<16x128xf32> -> vector<16x128xf32>
    %c0_23 = arith.constant 0 : index
    %c0_24 = arith.constant 0 : index
    %38 = vector.load %arg8[%c0_23, %c0_24] : memref<16x128xf32, #tpu.memory_space<vmem>>, vector<16x128xf32>
    tpu.vector_store %arg8[%c0_23, %c0_24], %37 {strides = array<i32>} : memref<16x128xf32, #tpu.memory_space<vmem>>, vector<16x128xf32>,
    return
  }
  func.func @transform_0(%arg0: i32) -> (i32, i32) {
    %c0_i32 = arith.constant 0 : i32
    %c0_i32_0 = arith.constant 0 : i32
    return %arg0, %c0_i32 : i32, i32
  }
  func.func @transform_1(%arg0: i32) -> (i32, i32) {
    %c0_i32 = arith.constant 0 : i32
    %c0_i32_0 = arith.constant 0 : i32
    %c0_i32_1 = arith.constant 0 : i32
    return %c0_i32, %c0_i32_0 : i32, i32
  }
  func.func @transform_2(%arg0: i32) -> (i32, i32) {
    %c0_i32 = arith.constant 0 : i32
    %c0_i32_0 = arith.constant 0 : i32
    %c0_i32_1 = arith.constant 0 : i32
    return %c0_i32, %c0_i32_0 : i32, i32
  }
  func.func @transform_3(%arg0: i32) -> (i32, i32) {
    %c0_i32 = arith.constant 0 : i32
    %c0_i32_0 = arith.constant 0 : i32
    %c0_i32_1 = arith.constant 0 : i32
    return %c0_i32, %c0_i32_0 : i32, i32
  }
  func.func @transform_4(%arg0: i32) -> (i32, i32) {
    %c0_i32 = arith.constant 0 : i32
    %c0_i32_0 = arith.constant 0 : i32
    %c0_i32_1 = arith.constant 0 : i32
    return %c0_i32, %c0_i32_0 : i32, i32
  }
  func.func @transform_5(%arg0: i32) -> (i32, i32) {
    %c0_i32 = arith.constant 0 : i32
    %c0_i32_0 = arith.constant 0 : i32
    %c0_i32_1 = arith.constant 0 : i32
    return %c0_i32, %c0_i32_0 : i32, i32
  }
  func.func @transform_6(%arg0: i32) -> (i32, i32) {
    %c0_i32 = arith.constant 0 : i32
    %c0_i32_0 = arith.constant 0 : i32
    %c0_i32_1 = arith.constant 0 : i32
    return %c0_i32, %c0_i32_0 : i32, i32
  }
  func.func @transform_7(%arg0: i32) -> (i32, i32) {
    %c0_i32 = arith.constant 0 : i32
    %c0_i32_0 = arith.constant 0 : i32
    return %arg0, %c0_i32 : i32, i32
  }
}

</mosaic_0001>

<llo_original>
// kernel: tpu_custom_call.1
$region0: #{tpu_custom_call.1}
  #allocation0 [shape = 'u32[]', space=smem, size = 0x4, offset = 0x4, fixed_abs, tag = 'smem constant byte address 0x4 - core index']
  #allocation1 [shape = 'u32[72,128]{1,0:T(1,128)}', space=vmem, size = 0x9000, scoped, tag = 'internal scratch']
  %s0 = inlined_call_operand.hbm [shape: f32[16,128], index: 0, kind: input, shape index: {}]
  %s1 = inlined_call_operand.hbm [shape: f32[128,128], index: 1, kind: input, shape index: {}]
  %s2 = inlined_call_operand.vmem [shape: f32[1,128], index: 2, kind: input, shape index: {}]
  %s3 = inlined_call_operand.hbm [shape: f32[128,128], index: 3, kind: input, shape index: {}]
  %s4 = inlined_call_operand.vmem [shape: f32[1,128], index: 4, kind: input, shape index: {}]
  %s5 = inlined_call_operand.hbm [shape: f32[128,128], index: 5, kind: input, shape index: {}]
  %s6 = inlined_call_operand.vmem [shape: f32[1,128], index: 6, kind: input, shape index: {}]
  %s7 = inlined_call_operand.hbm [shape: f32[16,128], index: 7, kind: output, shape index: {}]
  %s8 = sld [smem:[#allocation0]]
  $region54: #{tpu_custom_call.1} parent=0
    _
  %s10 = ssub.s32 1, %s8
  %s11 = scalar_select 0, %s10, %s8
  $region1: #{tpu_custom_call.1} parent=0
    #allocation2 [shape = 'u8[8192]{0}', space=vmem, size = 0x2000, scoped, tag = 'input window, operand 0, single buffered']
    #allocation3 [shape = 's32[1]{0}', space=sflag, size = 0x4, scoped, tag = 'scoped memory for tpu_custom_call.1']
    #allocation4 [shape = 's32[1]{0}', space=sflag, size = 0x4, scoped, tag = 'scoped memory for tpu_custom_call.1']
    #allocation5 [shape = 'u8[65536]{0}', space=vmem, size = 0x10000, scoped, tag = 'input window, operand 1, single buffered']
    #allocation6 [shape = 's32[1]{0}', space=sflag, size = 0x4, scoped, tag = 'scoped memory for tpu_custom_call.1']
    #allocation7 [shape = 'u8[65536]{0}', space=vmem, size = 0x10000, scoped, tag = 'input window, operand 3, single buffered']
    #allocation8 [shape = 'u8[65536]{0}', space=vmem, size = 0x10000, scoped, tag = 'input window, operand 5, single buffered']
    #allocation9 [shape = 's32[1]{0}', space=sflag, size = 0x4, scoped, tag = 'scoped memory for tpu_custom_call.1']
    #allocation10 [shape = 'u8[8192]{0}', space=vmem, size = 0x2000, scoped, tag = 'output window, operand 0, single buffered']
    %12 = vsyncpa [#allocation3], 0
    %13 = vsyncpa [#allocation6], 0
    %14 = vsyncpa [#allocation9], 0
    %15 = vsyncpa [#allocation4], 0
    // Predicated region
    $region2: #{tpu_custom_call.1} parent=1 // pred_check
      _
    $region3: #{tpu_custom_call.1} parent=1 // pred_check_branch
      %17 = sbr.rel (0) target = $region5
    $region4: #{tpu_custom_call.1} parent=1 // pred_region
      %19 = vsyncadd [#allocation3], 0
      %s20 = sshll.u32 %s0, 4
      %s21 = int_to_ptr.hbm [resolvable:$true] %s20
      %s22 = sshll.u32 [#allocation2], 4
      %s23 = int_to_ptr.vmem [resolvable:$true] %s22
      %28 = dma.hbm_to_vmem [thread:$0]  %s21, 256, %s23, [#allocation3], 128, 128, 8
    $region5: #{tpu_custom_call.1} parent=1 // pred_fallthru
      _
    // Predicated region
    $region6: #{tpu_custom_call.1} parent=1 // pred_check
      _
    $region7: #{tpu_custom_call.1} parent=1 // pred_check_branch
      %30 = sbr.rel (0) target = $region9
    $region8: #{tpu_custom_call.1} parent=1 // pred_region
      %32 = vsyncadd [#allocation6], 0
      %s33 = sshll.u32 %s1, 4
      %s34 = int_to_ptr.hbm [resolvable:$true] %s33
      %s35 = sshll.u32 [#allocation5], 4
      %s36 = int_to_ptr.vmem [resolvable:$true] %s35
      %41 = dma.hbm_to_vmem [thread:$0]  %s34, 2048, %s36, [#allocation6], 128, 128, 8
    $region9: #{tpu_custom_call.1} parent=1 // pred_fallthru
      _
    // Predicated region
    $region10: #{tpu_custom_call.1} parent=1 // pred_check
      _
    $region11: #{tpu_custom_call.1} parent=1 // pred_check_branch
      %43 = sbr.rel (0) target = $region13
    $region12: #{tpu_custom_call.1} parent=1 // pred_region
      _
    $region13: #{tpu_custom_call.1} parent=1 // pred_fallthru
      _
    // Predicated region
    $region14: #{tpu_custom_call.1} parent=1 // pred_check
      _
    $region15: #{tpu_custom_call.1} parent=1 // pred_check_branch
      %45 = sbr.rel (0) target = $region17
    $region16: #{tpu_custom_call.1} parent=1 // pred_region
      %47 = vsyncadd [#allocation6], 0
      %s48 = sshll.u32 %s3, 4
      %s49 = int_to_ptr.hbm [resolvable:$true] %s48
      %s50 = sshll.u32 [#allocation7], 4
      %s51 = int_to_ptr.vmem [resolvable:$true] %s50
      %56 = dma.hbm_to_vmem [thread:$0]  %s49, 2048, %s51, [#allocation6], 128, 128, 8
    $region17: #{tpu_custom_call.1} parent=1 // pred_fallthru
      _
    // Predicated region
    $region18: #{tpu_custom_call.1} parent=1 // pred_check
      _
    $region19: #{tpu_custom_call.1} parent=1 // pred_check_branch
      %58 = sbr.rel (0) target = $region21
    $region20: #{tpu_custom_call.1} parent=1 // pred_region
      _
    $region21: #{tpu_custom_call.1} parent=1 // pred_fallthru
      _
    // Predicated region
    $region22: #{tpu_custom_call.1} parent=1 // pred_check
      _
    $region23: #{tpu_custom_call.1} parent=1 // pred_check_branch
      %60 = sbr.rel (0) target = $region25
    $region24: #{tpu_custom_call.1} parent=1 // pred_region
      %62 = vsyncadd [#allocation9], 0
      %s63 = sshll.u32 %s5, 4
      %s64 = int_to_ptr.hbm [resolvable:$true] %s63
      %s65 = sshll.u32 [#allocation8], 4
      %s66 = int_to_ptr.vmem [resolvable:$true] %s65
      %71 = dma.hbm_to_vmem [thread:$0]  %s64, 2048, %s66, [#allocation9], 128, 128, 8
    $region25: #{tpu_custom_call.1} parent=1 // pred_fallthru
      _
    // Predicated region
    $region26: #{tpu_custom_call.1} parent=1 // pred_check
      _
    $region27: #{tpu_custom_call.1} parent=1 // pred_check_branch
      %73 = sbr.rel (0) target = $region29
    $region28: #{tpu_custom_call.1} parent=1 // pred_region
      _
    $region29: #{tpu_custom_call.1} parent=1 // pred_fallthru
      _
    // Predicated region
    $region30: #{tpu_custom_call.1} parent=1 // pred_check
      _
    $region31: #{tpu_custom_call.1} parent=1 // pred_check_branch
      %75 = sbr.rel (0) target = $region33
    $region32: #{tpu_custom_call.1} parent=1 // pred_region
      %77 = dma.done [#allocation3], 256
    $region33: #{tpu_custom_call.1} parent=1 // pred_fallthru
      _
    // Predicated region
    $region34: #{tpu_custom_call.1} parent=1 // pred_check
      _
    $region35: #{tpu_custom_call.1} parent=1 // pred_check_branch
      %79 = sbr.rel (0) target = $region37
    $region36: #{tpu_custom_call.1} parent=1 // pred_region
      %81 = dma.done [#allocation6], 2048
    $region37: #{tpu_custom_call.1} parent=1 // pred_fallthru
      _
    // Predicated region
    $region38: #{tpu_custom_call.1} parent=1 // pred_check
      _
    $region39: #{tpu_custom_call.1} parent=1 // pred_check_branch
      %83 = sbr.rel (0) target = $region41
    $region40: #{tpu_custom_call.1} parent=1 // pred_region
      %85 = dma.done [#allocation6], 2048
    $region41: #{tpu_custom_call.1} parent=1 // pred_fallthru
      _
    // Predicated region
    $region42: #{tpu_custom_call.1} parent=1 // pred_check
      _
    $region43: #{tpu_custom_call.1} parent=1 // pred_check_branch
      %87 = sbr.rel (0) target = $region45
    $region44: #{tpu_custom_call.1} parent=1 // pred_region
      %89 = dma.done [#allocation9], 2048
    $region45: #{tpu_custom_call.1} parent=1 // pred_fallthru
      _
    %v90 = vld [vmem:[#allocation2] sm:$0xff]
    %v91 = vld [vmem:[#allocation2 + $0x8] sm:$0xff]
    %v92 = vld [vmem:[#allocation5] sm:$0xff]
    %v93 = vld [vmem:[#allocation5 + $0x8] sm:$0xff]
    %v94 = vld [vmem:[#allocation5 + $0x10] sm:$0xff]
    %v95 = vld [vmem:[#allocation5 + $0x18] sm:$0xff]
    %v96 = vld [vmem:[#allocation5 + $0x20] sm:$0xff]
    %v97 = vld [vmem:[#allocation5 + $0x28] sm:$0xff]
    %v98 = vld [vmem:[#allocation5 + $0x30] sm:$0xff]
    %v99 = vld [vmem:[#allocation5 + $0x38] sm:$0xff]
    %v100 = vld [vmem:[#allocation5 + $0x40] sm:$0xff]
    %v101 = vld [vmem:[#allocation5 + $0x48] sm:$0xff]
    %v102 = vld [vmem:[#allocation5 + $0x50] sm:$0xff]
    %v103 = vld [vmem:[#allocation5 + $0x58] sm:$0xff]
    %v104 = vld [vmem:[#allocation5 + $0x60] sm:$0xff]
    %v105 = vld [vmem:[#allocation5 + $0x68] sm:$0xff]
    %v106 = vld [vmem:[#allocation5 + $0x70] sm:$0xff]
    %v107 = vld [vmem:[#allocation5 + $0x78] sm:$0xff]
    %v108 = vld [vmem:[%s2] sm:$0x1]
    %v110 = vperm.slane %v108, 0
    %112 = vmatpush.msra.mxu0 %v107
    %113 = vmatpush.msra.mxu0 %v106
    %114 = vmatpush.msra.mxu0 %v105
    %115 = vmatpush.msra.mxu0 %v104
    %116 = vmatpush.msra.mxu0 %v103
    %117 = vmatpush.msra.mxu0 %v102
    %118 = vmatpush.msra.mxu0 %v101
    %119 = vmatpush.msra.mxu0 %v100
    %120 = vmatpush.msra.mxu0 %v99
    %121 = vmatpush.msra.mxu0 %v98
    %122 = vmatpush.msra.mxu0 %v97
    %123 = vmatpush.msra.mxu0 %v96
    %124 = vmatpush.msra.mxu0 %v95
    %125 = vmatpush.msra.mxu0 %v94
    %126 = vmatpush.msra.mxu0 %v93
    %127 = vmatpush.msra.mxu0 %v92
    %128 = vmatmul.f32.gmra.mxu0 %v90
    %v129 = vpop.f32.mrf.mxu0
    %v130 = vadd.f32 %v110, %v129
    %131 = vmatmul.f32.gmra.mxu0 %v91
    %v132 = vpop.f32.mrf.mxu0
    %v133 = vadd.f32 %v110, %v132
    %134 = vdwg.mxu0
    %vm135 = vcmp.gt.f32.partialorder %v130, 0.0
    %vm136 = vcmp.gt.f32.partialorder %v133, 0.0
    %v137 = vmin.f32 %v130, 0.0
    %v138 = vmin.f32 %v133, 0.0
    %v139 = vmul.f32 %v137, 1.442695
    %v140 = vpow.pop %v139
    %v141 = vmul.f32 %v138, 1.442695
    %v142 = vpow.pop %v141
    %v143 = vsub.f32 %v140, 1.0
    %v144 = vsub.f32 %v142, 1.0
    %v145 = vsel %vm135, %v130, %v143
    %v146 = vsel %vm136, %v133, %v144
    %v147 = vld [vmem:[#allocation7] sm:$0xff]
    %v148 = vld [vmem:[#allocation7 + $0x8] sm:$0xff]
    %v149 = vld [vmem:[#allocation7 + $0x10] sm:$0xff]
    %v150 = vld [vmem:[#allocation7 + $0x18] sm:$0xff]
    %v151 = vld [vmem:[#allocation7 + $0x20] sm:$0xff]
    %v152 = vld [vmem:[#allocation7 + $0x28] sm:$0xff]
    %v153 = vld [vmem:[#allocation7 + $0x30] sm:$0xff]
    %v154 = vld [vmem:[#allocation7 + $0x38] sm:$0xff]
    %v155 = vld [vmem:[#allocation7 + $0x40] sm:$0xff]
    %v156 = vld [vmem:[#allocation7 + $0x48] sm:$0xff]
    %v157 = vld [vmem:[#allocation7 + $0x50] sm:$0xff]
    %v158 = vld [vmem:[#allocation7 + $0x58] sm:$0xff]
    %v159 = vld [vmem:[#allocation7 + $0x60] sm:$0xff]
    %v160 = vld [vmem:[#allocation7 + $0x68] sm:$0xff]
    %v161 = vld [vmem:[#allocation7 + $0x70] sm:$0xff]
    %v162 = vld [vmem:[#allocation7 + $0x78] sm:$0xff]
    %v163 = vld [vmem:[%s4] sm:$0x1]
    %v165 = vperm.slane %v163, 0
    %167 = vmatpush.msra.mxu0 %v162
    %168 = vmatpush.msra.mxu0 %v161
    %169 = vmatpush.msra.mxu0 %v160
    %170 = vmatpush.msra.mxu0 %v159
    %171 = vmatpush.msra.mxu0 %v158
    %172 = vmatpush.msra.mxu0 %v157
    %173 = vmatpush.msra.mxu0 %v156
    %174 = vmatpush.msra.mxu0 %v155
    %175 = vmatpush.msra.mxu0 %v154
    %176 = vmatpush.msra.mxu0 %v153
    %177 = vmatpush.msra.mxu0 %v152
    %178 = vmatpush.msra.mxu0 %v151
    %179 = vmatpush.msra.mxu0 %v150
    %180 = vmatpush.msra.mxu0 %v149
    %181 = vmatpush.msra.mxu0 %v148
    %182 = vmatpush.msra.mxu0 %v147
    %183 = vmatmul.f32.gmra.mxu0 %v145
    %v184 = vpop.f32.mrf.mxu0
    %v185 = vadd.f32 %v165, %v184
    %186 = vmatmul.f32.gmra.mxu0 %v146
    %v187 = vpop.f32.mrf.mxu0
    %v188 = vadd.f32 %v165, %v187
    %189 = vdwg.mxu0
    %vm190 = vcmp.gt.f32.partialorder %v185, 0.0
    %vm191 = vcmp.gt.f32.partialorder %v188, 0.0
    %v192 = vmin.f32 %v185, 0.0
    %v193 = vmin.f32 %v188, 0.0
    %v194 = vmul.f32 %v192, 1.442695
    %v195 = vpow.pop %v194
    %v196 = vmul.f32 %v193, 1.442695
    %v197 = vpow.pop %v196
    %v198 = vsub.f32 %v195, 1.0
    %v199 = vsub.f32 %v197, 1.0
    %v200 = vsel %vm190, %v185, %v198
    %v201 = vsel %vm191, %v188, %v199
    %v202 = vld [vmem:[#allocation8] sm:$0xff]
    %v203 = vld [vmem:[#allocation8 + $0x8] sm:$0xff]
    %v204 = vld [vmem:[#allocation8 + $0x10] sm:$0xff]
    %v205 = vld [vmem:[#allocation8 + $0x18] sm:$0xff]
    %v206 = vld [vmem:[#allocation8 + $0x20] sm:$0xff]
    %v207 = vld [vmem:[#allocation8 + $0x28] sm:$0xff]
    %v208 = vld [vmem:[#allocation8 + $0x30] sm:$0xff]
    %v209 = vld [vmem:[#allocation8 + $0x38] sm:$0xff]
    %v210 = vld [vmem:[#allocation8 + $0x40] sm:$0xff]
    %v211 = vld [vmem:[#allocation8 + $0x48] sm:$0xff]
    %v212 = vld [vmem:[#allocation8 + $0x50] sm:$0xff]
    %v213 = vld [vmem:[#allocation8 + $0x58] sm:$0xff]
    %v214 = vld [vmem:[#allocation8 + $0x60] sm:$0xff]
    %v215 = vld [vmem:[#allocation8 + $0x68] sm:$0xff]
    %v216 = vld [vmem:[#allocation8 + $0x70] sm:$0xff]
    %v217 = vld [vmem:[#allocation8 + $0x78] sm:$0xff]
    %v218 = vld [vmem:[%s6] sm:$0x1]
    %v220 = vperm.slane %v218, 0
    %222 = vmatpush.msra.mxu0 %v217
    %223 = vmatpush.msra.mxu0 %v216
    %224 = vmatpush.msra.mxu0 %v215
    %225 = vmatpush.msra.mxu0 %v214
    %226 = vmatpush.msra.mxu0 %v213
    %227 = vmatpush.msra.mxu0 %v212
    %228 = vmatpush.msra.mxu0 %v211
    %229 = vmatpush.msra.mxu0 %v210
    %230 = vmatpush.msra.mxu0 %v209
    %231 = vmatpush.msra.mxu0 %v208
    %232 = vmatpush.msra.mxu0 %v207
    %233 = vmatpush.msra.mxu0 %v206
    %234 = vmatpush.msra.mxu0 %v205
    %235 = vmatpush.msra.mxu0 %v204
    %236 = vmatpush.msra.mxu0 %v203
    %237 = vmatpush.msra.mxu0 %v202
    %238 = vmatmul.f32.gmra.mxu0 %v200
    %v239 = vpop.f32.mrf.mxu0
    %v240 = vadd.f32 %v220, %v239
    %241 = vmatmul.f32.gmra.mxu0 %v201
    %v242 = vpop.f32.mrf.mxu0
    %v243 = vadd.f32 %v220, %v242
    %244 = vdwg.mxu0
    %v245 = vsub.f32 0.0, %v240
    %v246 = vsub.f32 0.0, %v243
    %v247 = vmul.f32 %v245, 1.442695
    %v248 = vpow.pop %v247
    %v249 = vmul.f32 %v246, 1.442695
    %v250 = vpow.pop %v249
    %v251 = vadd.f32 %v248, 1.0
    %v252 = vadd.f32 %v250, 1.0
    %v253 = vrcp.pop %v251
    %v254 = vrcp.pop %v252
    %255 = vst [vmem:[#allocation10] sm:$0xff] %v253
    %256 = vst [vmem:[#allocation10 + $0x8] sm:$0xff] %v254
    // Predicated region
    $region46: #{tpu_custom_call.1} parent=1 // pred_check
      _
    $region47: #{tpu_custom_call.1} parent=1 // pred_check_branch
      %258 = sbr.rel (0) target = $region49
    $region48: #{tpu_custom_call.1} parent=1 // pred_region
      %260 = vsyncadd [#allocation4], 0
      %s261 = sshll.u32 [#allocation10], 4
      %s262 = int_to_ptr.vmem [resolvable:$true] %s261
      %s263 = sshll.u32 %s7, 4
      %s264 = int_to_ptr.hbm [resolvable:$true] %s263
      %269 = dma.vmem_to_hbm [thread:$0]  %s262, 256, %s264, [#allocation4], 128, 128, 8
    $region49: #{tpu_custom_call.1} parent=1 // pred_fallthru
      _
    // Predicated region
    $region50: #{tpu_custom_call.1} parent=1 // pred_check
      _
    $region51: #{tpu_custom_call.1} parent=1 // pred_check_branch
      %271 = sbr.rel (0) target = $region53
    $region52: #{tpu_custom_call.1} parent=1 // pred_region
      %273 = dma.done [#allocation4], 256
    $region53: #{tpu_custom_call.1} parent=1 // pred_fallthru
      _
    %274 = vsyncpa [#allocation3], 1
    %275 = vsyncpa [#allocation6], 1
    %276 = vsyncpa [#allocation9], 1
    %277 = vsyncpa [#allocation4], 1

</llo_original>
